<compile_context>
chip_gen: v5e
topology: v5e:2x2
jax: 0.10.0
libtpu: 0.0.40
codegen_flags: <defaults>
</compile_context>

<pallas_src>
import jax
import jax.numpy as jnp
from jax.experimental import pallas as pl
from jax.experimental.pallas import tpu as pltpu


def _round_up(x, m):
    return (x + m - 1) // m * m


def _cdiv(a, b):
    return (a + b - 1) // b


def _make_gmp_kernel(memory_length, degree):
    M, D = memory_length, degree

    def kernel(w_ref, x_ref, o_ref):
        # w_ref: (C, D*M) f32 SMEM  (whole weight table; scalar loads only)
        # TODO(synk): for very large channel counts, switch to a per-channel blocked
        #   SMEM spec / scalar prefetch so SMEM usage stays independent of C.
        # x_ref: (1, 2, RT, T_pad) f32 VMEM -- [re/im, row, time (M-1 leading zeros)]
        # o_ref: (1, 2, RT, N_pad) f32 VMEM
        c = pl.program_id(0)
        n_pad = o_ref.shape[-1]
        t_pad = x_ref.shape[-1]

        xr = x_ref[0, 0]                                  # (RT, T_pad)
        xi = x_ref[0, 1]
        amp = jnp.sqrt(xr * xr + xi * xi) if D > 1 else None

        acc_r = None
        acc_i = None
        # M and D are small compile-time constants -> static unroll is cheap here.
        for m in range(M):
            if m == 0:
                xr_m, xi_m, amp_m = xr, xi, amp
            else:
                # rolled[j] = orig[j + m] for j < N_pad (circular tail never read
                # because T_pad >= N_pad + M - 1).  Rolls land on the XLU slot and
                # leave a 128-aligned slice below -> no per-vreg rotate+blend on VALU.
                sh = t_pad - m                           # positive equivalent of -m
                xr_m = pltpu.roll(xr, shift=sh, axis=1)
                xi_m = pltpu.roll(xi, shift=sh, axis=1)
                amp_m = pltpu.roll(amp, shift=sh, axis=1) if D > 1 else None
            xr_w = xr_m[:, :n_pad]                        # aligned, lane-dense
            xi_w = xi_m[:, :n_pad]

            if D > 1:
                # Horner on the window only:
                #   coeff = W[c,m] + sum_{p>=1} W[c, p*M+m] * amp^p
                amp_w = amp_m[:, :n_pad]
                cm = w_ref[c, (D - 1) * M + m] * amp_w
                for p in range(D - 2, 0, -1):
                    cm = (cm + w_ref[c, p * M + m]) * amp_w
                cm = cm + w_ref[c, m]                     # scalar added once
                cr = xr_w * cm
                ci = xi_w * cm
            else:
                cr = xr_w * w_ref[c, m]
                ci = xi_w * w_ref[c, m]

            if acc_r is None:                             # init from tap 0
                acc_r, acc_i = cr, ci
            else:
                acc_r = acc_r + cr
                acc_i = acc_i + ci

        o_ref[0, 0] = acc_r                               # full lane-dense stores
        o_ref[0, 1] = acc_i

    return kernel


def gmp_forward(x, weight, memory_length, degree):
    """x: (B, N, C, 2) float32, weight: (C, degree*memory_length) float32."""
    B, N, C, _ = x.shape
    M = memory_length
    D = degree
    F = D * M
    assert weight.shape == (C, F), weight.shape

    # Lane-dense layout: time on lanes (pad N up to 128 multiple), batch rows on
    # sublanes.  Input time axis must cover index N_pad + M - 2 for uniform windows.
    N_pad = _round_up(max(N, 1), 128)
    T_pad = _round_up(N_pad + M - 1, 128)

    # Generation-aware VMEM budget (v5e/v6e: 128 MiB physical, v7x: 64 MiB per TC).
    try:
        vmem_cap = int(pltpu.get_tpu_info().vmem_capacity_bytes)
    except Exception:
        vmem_cap = 64 * 1024 * 1024                     # conservative (v7x) fallback
    budget = min(int(vmem_cap * 0.65), 80 * 1024 * 1024)
    vmem_limit = int(min(vmem_cap - 4 * 1024 * 1024, budget + 24 * 1024 * 1024))

    # Per-row f32 bytes: double-buffered input (4*T_pad) + amp + rolled copies
    # (generous) + double-buffered output (4*N_pad) + acc / Horner temporaries.
    bytes_per_row = 4 * (16 * T_pad + 12 * N_pad)
    if 8 * bytes_per_row > budget:
        # TODO(synk): add a time-tiled grid axis with an (M-1)-lane halo for very
        # long sequences instead of failing here.
        raise ValueError("sequence too long for a single time block on this TPU")
    rt_max = max(8, (budget // bytes_per_row) // 8 * 8)

    # Minimal-slack row tiling: pad B to 8 first, then pick a tile that divides the
    # padded batch (waste < 8 rows per tile instead of up to rt-8 total).
    B8 = _round_up(B, 8)
    n_tiles = _cdiv(B8, rt_max)
    if C * n_tiles < 2 and B8 >= 16:
        n_tiles = 2                                      # give both v7x TCs work
    rt = _round_up(_cdiv(B8, n_tiles), 8)
    B_pad = rt * n_tiles

    # Single fused transpose+pad producing the kernel layout (C, 2, B_pad, T_pad):
    #   planes[c, comp, b, M-1+n] = x[b, n, c, comp]; the M-1 leading zeros realise
    #   the causal memory taps.
    planes = jnp.transpose(x.astype(jnp.float32), (2, 3, 0, 1))          # (C, 2, B, N)
    planes = jnp.pad(planes, ((0, 0), (0, 0), (0, B_pad - B),
                              (M - 1, T_pad - (M - 1) - N)))

    w = weight.astype(jnp.float32)                                       # (C, F) SMEM

    kernel = _make_gmp_kernel(M, D)
    grid = (C, n_tiles)

    cost = pl.CostEstimate(
        flops=int(2 * B * N * C * M * (D + 1) + 3 * B * N * C),
        transcendentals=int(B_pad * T_pad * C),
        bytes_accessed=int(4 * (2 * B_pad * T_pad * C + 2 * B_pad * N_pad * C + C * F)),
    )

    out = pl.pallas_call(
        kernel,
        out_shape=jax.ShapeDtypeStruct((C, 2, B_pad, N_pad), jnp.float32),
        grid=grid,
        in_specs=[
            pl.BlockSpec(memory_space=pltpu.MemorySpace.SMEM),            # weights
            pl.BlockSpec((1, 2, rt, T_pad), lambda c, r: (c, 0, r, 0)),   # signal planes
        ],
        out_specs=pl.BlockSpec((1, 2, rt, N_pad), lambda c, r: (c, 0, r, 0)),
        compiler_params=pltpu.CompilerParams(
            dimension_semantics=("parallel", "parallel"),
            vmem_limit_bytes=vmem_limit),
        cost_estimate=cost,
    )(w, planes)

    # (C, 2, B_pad, N_pad) -> crop padding -> (B, N, C, 2)
    return jnp.transpose(out[:, :, :B, :N], (2, 3, 0, 1))


def gmp_reference(x, weight, memory_length, degree):
    """Pure-JAX transliteration of the PyTorch forward (complex math)."""
    B, N, C, _ = x.shape
    M = memory_length
    xc = jnp.transpose(x[..., 0] + 1j * x[..., 1], (0, 2, 1))            # (B, C, N) complex64
    padded = jnp.concatenate(
        [jnp.zeros((B, C, M - 1), xc.dtype), xc], axis=2)                # (B, C, T)
    idx = jnp.arange(N)[:, None] + jnp.arange(M)[None, :]                # unfold indices
    windows_x = padded[:, :, idx]                                        # (B, C, N, M)
    amp = jnp.abs(padded)
    x_degree = jnp.stack([amp ** i for i in range(1, degree)], axis=1)   # (B, D-1, C, T)
    windows_deg = x_degree[:, :, :, idx]                                 # (B, D-1, C, N, M)
    mul = windows_x[:, None] * windows_deg                               # (B, D-1, C, N, M)
    mul = jnp.transpose(mul, (0, 2, 3, 1, 4)).reshape(B, C, N, -1)
    x_in = jnp.concatenate([windows_x, mul], axis=3)                     # (B, C, N, degree*M)
    prod = x_in * weight[None, :, None, :]
    cout = jnp.transpose(prod.sum(axis=3), (0, 2, 1))                    # (B, N, C)
    return jnp.stack([cout.real, cout.imag], axis=3)


if __name__ == "__main__":
    # module defaults: memory_length=11, degree=5, n_channels=1
    memory_length = 11
    degree = 5
    n_channels = 1
    B, N, C = 2, 16, n_channels

    # TODO(synk): original __init__ sizes Weight as (C, W*memory_length)=(1,495), which is
    # incompatible with the forward's broadcast (needs degree*memory_length=55 features);
    # we size Weight to the shape the forward actually consumes.
    F = degree * memory_length

    key = jax.random.PRNGKey(0)
    k_x, k_w = jax.random.split(key)

    x = jax.random.normal(k_x, (B, N, C, 2), dtype=jnp.float32)

    # deterministic xavier_uniform_ equivalent: bound = sqrt(6 / (fan_in + fan_out))
    bound = (6.0 / (F + n_channels)) ** 0.5
    weight = jax.random.uniform(k_w, (n_channels, F), jnp.float32, -bound, bound)

    out = gmp_forward(x, weight, memory_length, degree)
    out = jax.block_until_ready(out)

    ref = gmp_reference(x, weight, memory_length, degree)
    assert out.shape == (B, N, C, 2), out.shape
    assert jnp.allclose(out, ref, atol=1e-4, rtol=1e-4), (
        float(jnp.max(jnp.abs(out - ref))))

    print("KERNEL_OK")
</pallas_src>

<mosaic_0001>
module attributes {stable_mosaic.version = 11 : i64} {
  func.func @kernel(%arg0: i32, %arg1: i32, %arg2: memref<1x55xf32, #tpu.memory_space<smem>>, %arg3: memref<1x2x8x256xf32, #tpu.memory_space<vmem>>, %arg4: memref<1x2x8x128xf32, #tpu.memory_space<vmem>>) attributes {dimension_semantics = [#tpu.dimension_semantics<parallel>, #tpu.dimension_semantics<parallel>], iteration_bounds = array<i64: 1, 1>, scalar_prefetch = 0 : i64, scratch_operands = 0 : i64, tpu.core_type = #tpu.core_type<tc>, window_params = [{transform_indices = @transform_0, window_bounds = array<i64: 1, 55>}, {transform_indices = @transform_1, window_bounds = array<i64: 1, 2, 8, 256>}, {transform_indices = @transform_2, window_bounds = array<i64: 1, 2, 8, 128>}]} {
    %c0 = arith.constant 0 : index
    %c0_0 = arith.constant 0 : index
    %c0_1 = arith.constant 0 : index
    %c0_2 = arith.constant 0 : index
    %0 = vector.load %arg3[%c0, %c0_0, %c0_1, %c0_2] : memref<1x2x8x256xf32, #tpu.memory_space<vmem>>, vector<1x1x8x256xf32>
    %1 = vector.shape_cast %0 : vector<1x1x8x256xf32> to vector<8x256xf32>
    %c0_3 = arith.constant 0 : index
    %c1 = arith.constant 1 : index
    %c0_4 = arith.constant 0 : index
    %c0_5 = arith.constant 0 : index
    %2 = vector.load %arg3[%c0_3, %c1, %c0_4, %c0_5] : memref<1x2x8x256xf32, #tpu.memory_space<vmem>>, vector<1x1x8x256xf32>
    %3 = vector.shape_cast %2 : vector<1x1x8x256xf32> to vector<8x256xf32>
    %4 = arith.mulf %1, %1 : vector<8x256xf32>
    %5 = arith.mulf %3, %3 : vector<8x256xf32>
    %6 = arith.addf %4, %5 : vector<8x256xf32>
    %7 = math.sqrt %6 : vector<8x256xf32>
    %8 = vector.extract_strided_slice %1 {offsets = [0, 0], sizes = [8, 128], strides = [1, 1]} : vector<8x256xf32> to vector<8x128xf32>
    %9 = vector.extract_strided_slice %3 {offsets = [0, 0], sizes = [8, 128], strides = [1, 1]} : vector<8x256xf32> to vector<8x128xf32>
    %10 = vector.extract_strided_slice %7 {offsets = [0, 0], sizes = [8, 128], strides = [1, 1]} : vector<8x256xf32> to vector<8x128xf32>
    %11 = arith.index_cast %arg0 : i32 to index
    %c44 = arith.constant 44 : index
    %12 = memref.load %arg2[%11, %c44] : memref<1x55xf32, #tpu.memory_space<smem>>
    %13 = vector.broadcast %12 : f32 to vector<8x128xf32>
    %14 = arith.mulf %13, %10 : vector<8x128xf32>
    %15 = arith.index_cast %arg0 : i32 to index
    %c33 = arith.constant 33 : index
    %16 = memref.load %arg2[%15, %c33] : memref<1x55xf32, #tpu.memory_space<smem>>
    %17 = vector.broadcast %16 : f32 to vector<8x128xf32>
    %18 = arith.addf %14, %17 : vector<8x128xf32>
    %19 = arith.mulf %18, %10 : vector<8x128xf32>
    %20 = arith.index_cast %arg0 : i32 to index
    %c22 = arith.constant 22 : index
    %21 = memref.load %arg2[%20, %c22] : memref<1x55xf32, #tpu.memory_space<smem>>
    %22 = vector.broadcast %21 : f32 to vector<8x128xf32>
    %23 = arith.addf %19, %22 : vector<8x128xf32>
    %24 = arith.mulf %23, %10 : vector<8x128xf32>
    %25 = arith.index_cast %arg0 : i32 to index
    %c11 = arith.constant 11 : index
    %26 = memref.load %arg2[%25, %c11] : memref<1x55xf32, #tpu.memory_space<smem>>
    %27 = vector.broadcast %26 : f32 to vector<8x128xf32>
    %28 = arith.addf %24, %27 : vector<8x128xf32>
    %29 = arith.mulf %28, %10 : vector<8x128xf32>
    %30 = arith.index_cast %arg0 : i32 to index
    %c0_6 = arith.constant 0 : index
    %31 = memref.load %arg2[%30, %c0_6] : memref<1x55xf32, #tpu.memory_space<smem>>
    %32 = vector.broadcast %31 : f32 to vector<8x128xf32>
    %33 = arith.addf %29, %32 : vector<8x128xf32>
    %34 = arith.mulf %8, %33 : vector<8x128xf32>
    %35 = arith.mulf %9, %33 : vector<8x128xf32>
    %c255_i32 = arith.constant 255 : i32
    %36 = tpu.dynamic_rotate %1 by %c255_i32 dim 1 : vector<8x256xf32>, i32 -> vector<8x256xf32>
    %c255_i32_7 = arith.constant 255 : i32
    %37 = tpu.dynamic_rotate %3 by %c255_i32_7 dim 1 : vector<8x256xf32>, i32 -> vector<8x256xf32>
    %c255_i32_8 = arith.constant 255 : i32
    %38 = tpu.dynamic_rotate %7 by %c255_i32_8 dim 1 : vector<8x256xf32>, i32 -> vector<8x256xf32>
    %39 = vector.extract_strided_slice %36 {offsets = [0, 0], sizes = [8, 128], strides = [1, 1]} : vector<8x256xf32> to vector<8x128xf32>
    %40 = vector.extract_strided_slice %37 {offsets = [0, 0], sizes = [8, 128], strides = [1, 1]} : vector<8x256xf32> to vector<8x128xf32>
    %41 = vector.extract_strided_slice %38 {offsets = [0, 0], sizes = [8, 128], strides = [1, 1]} : vector<8x256xf32> to vector<8x128xf32>
    %42 = arith.index_cast %arg0 : i32 to index
    %c45 = arith.constant 45 : index
    %43 = memref.load %arg2[%42, %c45] : memref<1x55xf32, #tpu.memory_space<smem>>
    %44 = vector.broadcast %43 : f32 to vector<8x128xf32>
    %45 = arith.mulf %44, %41 : vector<8x128xf32>
    %46 = arith.index_cast %arg0 : i32 to index
    %c34 = arith.constant 34 : index
    %47 = memref.load %arg2[%46, %c34] : memref<1x55xf32, #tpu.memory_space<smem>>
    %48 = vector.broadcast %47 : f32 to vector<8x128xf32>
    %49 = arith.addf %45, %48 : vector<8x128xf32>
    %50 = arith.mulf %49, %41 : vector<8x128xf32>
    %51 = arith.index_cast %arg0 : i32 to index
    %c23 = arith.constant 23 : index
    %52 = memref.load %arg2[%51, %c23] : memref<1x55xf32, #tpu.memory_space<smem>>
    %53 = vector.broadcast %52 : f32 to vector<8x128xf32>
    %54 = arith.addf %50, %53 : vector<8x128xf32>
    %55 = arith.mulf %54, %41 : vector<8x128xf32>
    %56 = arith.index_cast %arg0 : i32 to index
    %c12 = arith.constant 12 : index
    %57 = memref.load %arg2[%56, %c12] : memref<1x55xf32, #tpu.memory_space<smem>>
    %58 = vector.broadcast %57 : f32 to vector<8x128xf32>
    %59 = arith.addf %55, %58 : vector<8x128xf32>
    %60 = arith.mulf %59, %41 : vector<8x128xf32>
    %61 = arith.index_cast %arg0 : i32 to index
    %c1_9 = arith.constant 1 : index
    %62 = memref.load %arg2[%61, %c1_9] : memref<1x55xf32, #tpu.memory_space<smem>>
    %63 = vector.broadcast %62 : f32 to vector<8x128xf32>
    %64 = arith.addf %60, %63 : vector<8x128xf32>
    %65 = arith.mulf %39, %64 : vector<8x128xf32>
    %66 = arith.mulf %40, %64 : vector<8x128xf32>
    %67 = arith.addf %34, %65 : vector<8x128xf32>
    %68 = arith.addf %35, %66 : vector<8x128xf32>
    %c254_i32 = arith.constant 254 : i32
    %69 = tpu.dynamic_rotate %1 by %c254_i32 dim 1 : vector<8x256xf32>, i32 -> vector<8x256xf32>
    %c254_i32_10 = arith.constant 254 : i32
    %70 = tpu.dynamic_rotate %3 by %c254_i32_10 dim 1 : vector<8x256xf32>, i32 -> vector<8x256xf32>
    %c254_i32_11 = arith.constant 254 : i32
    %71 = tpu.dynamic_rotate %7 by %c254_i32_11 dim 1 : vector<8x256xf32>, i32 -> vector<8x256xf32>
    %72 = vector.extract_strided_slice %69 {offsets = [0, 0], sizes = [8, 128], strides = [1, 1]} : vector<8x256xf32> to vector<8x128xf32>
    %73 = vector.extract_strided_slice %70 {offsets = [0, 0], sizes = [8, 128], strides = [1, 1]} : vector<8x256xf32> to vector<8x128xf32>
    %74 = vector.extract_strided_slice %71 {offsets = [0, 0], sizes = [8, 128], strides = [1, 1]} : vector<8x256xf32> to vector<8x128xf32>
    %75 = arith.index_cast %arg0 : i32 to index
    %c46 = arith.constant 46 : index
    %76 = memref.load %arg2[%75, %c46] : memref<1x55xf32, #tpu.memory_space<smem>>
    %77 = vector.broadcast %76 : f32 to vector<8x128xf32>
    %78 = arith.mulf %77, %74 : vector<8x128xf32>
    %79 = arith.index_cast %arg0 : i32 to index
    %c35 = arith.constant 35 : index
    %80 = memref.load %arg2[%79, %c35] : memref<1x55xf32, #tpu.memory_space<smem>>
    %81 = vector.broadcast %80 : f32 to vector<8x128xf32>
    %82 = arith.addf %78, %81 : vector<8x128xf32>
    %83 = arith.mulf %82, %74 : vector<8x128xf32>
    %84 = arith.index_cast %arg0 : i32 to index
    %c24 = arith.constant 24 : index
    %85 = memref.load %arg2[%84, %c24] : memref<1x55xf32, #tpu.memory_space<smem>>
    %86 = vector.broadcast %85 : f32 to vector<8x128xf32>
    %87 = arith.addf %83, %86 : vector<8x128xf32>
    %88 = arith.mulf %87, %74 : vector<8x128xf32>
    %89 = arith.index_cast %arg0 : i32 to index
    %c13 = arith.constant 13 : index
    %90 = memref.load %arg2[%89, %c13] : memref<1x55xf32, #tpu.memory_space<smem>>
    %91 = vector.broadcast %90 : f32 to vector<8x128xf32>
    %92 = arith.addf %88, %91 : vector<8x128xf32>
    %93 = arith.mulf %92, %74 : vector<8x128xf32>
    %94 = arith.index_cast %arg0 : i32 to index
    %c2 = arith.constant 2 : index
    %95 = memref.load %arg2[%94, %c2] : memref<1x55xf32, #tpu.memory_space<smem>>
    %96 = vector.broadcast %95 : f32 to vector<8x128xf32>
    %97 = arith.addf %93, %96 : vector<8x128xf32>
    %98 = arith.mulf %72, %97 : vector<8x128xf32>
    %99 = arith.mulf %73, %97 : vector<8x128xf32>
    %100 = arith.addf %67, %98 : vector<8x128xf32>
    %101 = arith.addf %68, %99 : vector<8x128xf32>
    %c253_i32 = arith.constant 253 : i32
    %102 = tpu.dynamic_rotate %1 by %c253_i32 dim 1 : vector<8x256xf32>, i32 -> vector<8x256xf32>
    %c253_i32_12 = arith.constant 253 : i32
    %103 = tpu.dynamic_rotate %3 by %c253_i32_12 dim 1 : vector<8x256xf32>, i32 -> vector<8x256xf32>
    %c253_i32_13 = arith.constant 253 : i32
    %104 = tpu.dynamic_rotate %7 by %c253_i32_13 dim 1 : vector<8x256xf32>, i32 -> vector<8x256xf32>
    %105 = vector.extract_strided_slice %102 {offsets = [0, 0], sizes = [8, 128], strides = [1, 1]} : vector<8x256xf32> to vector<8x128xf32>
    %106 = vector.extract_strided_slice %103 {offsets = [0, 0], sizes = [8, 128], strides = [1, 1]} : vector<8x256xf32> to vector<8x128xf32>
    %107 = vector.extract_strided_slice %104 {offsets = [0, 0], sizes = [8, 128], strides = [1, 1]} : vector<8x256xf32> to vector<8x128xf32>
    %108 = arith.index_cast %arg0 : i32 to index
    %c47 = arith.constant 47 : index
    %109 = memref.load %arg2[%108, %c47] : memref<1x55xf32, #tpu.memory_space<smem>>
    %110 = vector.broadcast %109 : f32 to vector<8x128xf32>
    %111 = arith.mulf %110, %107 : vector<8x128xf32>
    %112 = arith.index_cast %arg0 : i32 to index
    %c36 = arith.constant 36 : index
    %113 = memref.load %arg2[%112, %c36] : memref<1x55xf32, #tpu.memory_space<smem>>
    %114 = vector.broadcast %113 : f32 to vector<8x128xf32>
    %115 = arith.addf %111, %114 : vector<8x128xf32>
    %116 = arith.mulf %115, %107 : vector<8x128xf32>
    %117 = arith.index_cast %arg0 : i32 to index
    %c25 = arith.constant 25 : index
    %118 = memref.load %arg2[%117, %c25] : memref<1x55xf32, #tpu.memory_space<smem>>
    %119 = vector.broadcast %118 : f32 to vector<8x128xf32>
    %120 = arith.addf %116, %119 : vector<8x128xf32>
    %121 = arith.mulf %120, %107 : vector<8x128xf32>
    %122 = arith.index_cast %arg0 : i32 to index
    %c14 = arith.constant 14 : index
    %123 = memref.load %arg2[%122, %c14] : memref<1x55xf32, #tpu.memory_space<smem>>
    %124 = vector.broadcast %123 : f32 to vector<8x128xf32>
    %125 = arith.addf %121, %124 : vector<8x128xf32>
    %126 = arith.mulf %125, %107 : vector<8x128xf32>
    %127 = arith.index_cast %arg0 : i32 to index
    %c3 = arith.constant 3 : index
    %128 = memref.load %arg2[%127, %c3] : memref<1x55xf32, #tpu.memory_space<smem>>
    %129 = vector.broadcast %128 : f32 to vector<8x128xf32>
    %130 = arith.addf %126, %129 : vector<8x128xf32>
    %131 = arith.mulf %105, %130 : vector<8x128xf32>
    %132 = arith.mulf %106, %130 : vector<8x128xf32>
    %133 = arith.addf %100, %131 : vector<8x128xf32>
    %134 = arith.addf %101, %132 : vector<8x128xf32>
    %c252_i32 = arith.constant 252 : i32
    %135 = tpu.dynamic_rotate %1 by %c252_i32 dim 1 : vector<8x256xf32>, i32 -> vector<8x256xf32>
    %c252_i32_14 = arith.constant 252 : i32
    %136 = tpu.dynamic_rotate %3 by %c252_i32_14 dim 1 : vector<8x256xf32>, i32 -> vector<8x256xf32>
    %c252_i32_15 = arith.constant 252 : i32
    %137 = tpu.dynamic_rotate %7 by %c252_i32_15 dim 1 : vector<8x256xf32>, i32 -> vector<8x256xf32>
    %138 = vector.extract_strided_slice %135 {offsets = [0, 0], sizes = [8, 128], strides = [1, 1]} : vector<8x256xf32> to vector<8x128xf32>
    %139 = vector.extract_strided_slice %136 {offsets = [0, 0], sizes = [8, 128], strides = [1, 1]} : vector<8x256xf32> to vector<8x128xf32>
    %140 = vector.extract_strided_slice %137 {offsets = [0, 0], sizes = [8, 128], strides = [1, 1]} : vector<8x256xf32> to vector<8x128xf32>
    %141 = arith.index_cast %arg0 : i32 to index
    %c48 = arith.constant 48 : index
    %142 = memref.load %arg2[%141, %c48] : memref<1x55xf32, #tpu.memory_space<smem>>
    %143 = vector.broadcast %142 : f32 to vector<8x128xf32>
    %144 = arith.mulf %143, %140 : vector<8x128xf32>
    %145 = arith.index_cast %arg0 : i32 to index
    %c37 = arith.constant 37 : index
    %146 = memref.load %arg2[%145, %c37] : memref<1x55xf32, #tpu.memory_space<smem>>
    %147 = vector.broadcast %146 : f32 to vector<8x128xf32>
    %148 = arith.addf %144, %147 : vector<8x128xf32>
    %149 = arith.mulf %148, %140 : vector<8x128xf32>
    %150 = arith.index_cast %arg0 : i32 to index
    %c26 = arith.constant 26 : index
    %151 = memref.load %arg2[%150, %c26] : memref<1x55xf32, #tpu.memory_space<smem>>
    %152 = vector.broadcast %151 : f32 to vector<8x128xf32>
    %153 = arith.addf %149, %152 : vector<8x128xf32>
    %154 = arith.mulf %153, %140 : vector<8x128xf32>
    %155 = arith.index_cast %arg0 : i32 to index
    %c15 = arith.constant 15 : index
    %156 = memref.load %arg2[%155, %c15] : memref<1x55xf32, #tpu.memory_space<smem>>
    %157 = vector.broadcast %156 : f32 to vector<8x128xf32>
    %158 = arith.addf %154, %157 : vector<8x128xf32>
    %159 = arith.mulf %158, %140 : vector<8x128xf32>
    %160 = arith.index_cast %arg0 : i32 to index
    %c4 = arith.constant 4 : index
    %161 = memref.load %arg2[%160, %c4] : memref<1x55xf32, #tpu.memory_space<smem>>
    %162 = vector.broadcast %161 : f32 to vector<8x128xf32>
    %163 = arith.addf %159, %162 : vector<8x128xf32>
    %164 = arith.mulf %138, %163 : vector<8x128xf32>
    %165 = arith.mulf %139, %163 : vector<8x128xf32>
    %166 = arith.addf %133, %164 : vector<8x128xf32>
    %167 = arith.addf %134, %165 : vector<8x128xf32>
    %c251_i32 = arith.constant 251 : i32
    %168 = tpu.dynamic_rotate %1 by %c251_i32 dim 1 : vector<8x256xf32>, i32 -> vector<8x256xf32>
    %c251_i32_16 = arith.constant 251 : i32
    %169 = tpu.dynamic_rotate %3 by %c251_i32_16 dim 1 : vector<8x256xf32>, i32 -> vector<8x256xf32>
    %c251_i32_17 = arith.constant 251 : i32
    %170 = tpu.dynamic_rotate %7 by %c251_i32_17 dim 1 : vector<8x256xf32>, i32 -> vector<8x256xf32>
    %171 = vector.extract_strided_slice %168 {offsets = [0, 0], sizes = [8, 128], strides = [1, 1]} : vector<8x256xf32> to vector<8x128xf32>
    %172 = vector.extract_strided_slice %169 {offsets = [0, 0], sizes = [8, 128], strides = [1, 1]} : vector<8x256xf32> to vector<8x128xf32>
    %173 = vector.extract_strided_slice %170 {offsets = [0, 0], sizes = [8, 128], strides = [1, 1]} : vector<8x256xf32> to vector<8x128xf32>
    %174 = arith.index_cast %arg0 : i32 to index
    %c49 = arith.constant 49 : index
    %175 = memref.load %arg2[%174, %c49] : memref<1x55xf32, #tpu.memory_space<smem>>
    %176 = vector.broadcast %175 : f32 to vector<8x128xf32>
    %177 = arith.mulf %176, %173 : vector<8x128xf32>
    %178 = arith.index_cast %arg0 : i32 to index
    %c38 = arith.constant 38 : index
    %179 = memref.load %arg2[%178, %c38] : memref<1x55xf32, #tpu.memory_space<smem>>
    %180 = vector.broadcast %179 : f32 to vector<8x128xf32>
    %181 = arith.addf %177, %180 : vector<8x128xf32>
    %182 = arith.mulf %181, %173 : vector<8x128xf32>
    %183 = arith.index_cast %arg0 : i32 to index
    %c27 = arith.constant 27 : index
    %184 = memref.load %arg2[%183, %c27] : memref<1x55xf32, #tpu.memory_space<smem>>
    %185 = vector.broadcast %184 : f32 to vector<8x128xf32>
    %186 = arith.addf %182, %185 : vector<8x128xf32>
    %187 = arith.mulf %186, %173 : vector<8x128xf32>
    %188 = arith.index_cast %arg0 : i32 to index
    %c16 = arith.constant 16 : index
    %189 = memref.load %arg2[%188, %c16] : memref<1x55xf32, #tpu.memory_space<smem>>
    %190 = vector.broadcast %189 : f32 to vector<8x128xf32>
    %191 = arith.addf %187, %190 : vector<8x128xf32>
    %192 = arith.mulf %191, %173 : vector<8x128xf32>
    %193 = arith.index_cast %arg0 : i32 to index
    %c5 = arith.constant 5 : index
    %194 = memref.load %arg2[%193, %c5] : memref<1x55xf32, #tpu.memory_space<smem>>
    %195 = vector.broadcast %194 : f32 to vector<8x128xf32>
    %196 = arith.addf %192, %195 : vector<8x128xf32>
    %197 = arith.mulf %171, %196 : vector<8x128xf32>
    %198 = arith.mulf %172, %196 : vector<8x128xf32>
    %199 = arith.addf %166, %197 : vector<8x128xf32>
    %200 = arith.addf %167, %198 : vector<8x128xf32>
    %c250_i32 = arith.constant 250 : i32
    %201 = tpu.dynamic_rotate %1 by %c250_i32 dim 1 : vector<8x256xf32>, i32 -> vector<8x256xf32>
    %c250_i32_18 = arith.constant 250 : i32
    %202 = tpu.dynamic_rotate %3 by %c250_i32_18 dim 1 : vector<8x256xf32>, i32 -> vector<8x256xf32>
    %c250_i32_19 = arith.constant 250 : i32
    %203 = tpu.dynamic_rotate %7 by %c250_i32_19 dim 1 : vector<8x256xf32>, i32 -> vector<8x256xf32>
    %204 = vector.extract_strided_slice %201 {offsets = [0, 0], sizes = [8, 128], strides = [1, 1]} : vector<8x256xf32> to vector<8x128xf32>
    %205 = vector.extract_strided_slice %202 {offsets = [0, 0], sizes = [8, 128], strides = [1, 1]} : vector<8x256xf32> to vector<8x128xf32>
    %206 = vector.extract_strided_slice %203 {offsets = [0, 0], sizes = [8, 128], strides = [1, 1]} : vector<8x256xf32> to vector<8x128xf32>
    %207 = arith.index_cast %arg0 : i32 to index
    %c50 = arith.constant 50 : index
    %208 = memref.load %arg2[%207, %c50] : memref<1x55xf32, #tpu.memory_space<smem>>
    %209 = vector.broadcast %208 : f32 to vector<8x128xf32>
    %210 = arith.mulf %209, %206 : vector<8x128xf32>
    %211 = arith.index_cast %arg0 : i32 to index
    %c39 = arith.constant 39 : index
    %212 = memref.load %arg2[%211, %c39] : memref<1x55xf32, #tpu.memory_space<smem>>
    %213 = vector.broadcast %212 : f32 to vector<8x128xf32>
    %214 = arith.addf %210, %213 : vector<8x128xf32>
    %215 = arith.mulf %214, %206 : vector<8x128xf32>
    %216 = arith.index_cast %arg0 : i32 to index
    %c28 = arith.constant 28 : index
    %217 = memref.load %arg2[%216, %c28] : memref<1x55xf32, #tpu.memory_space<smem>>
    %218 = vector.broadcast %217 : f32 to vector<8x128xf32>
    %219 = arith.addf %215, %218 : vector<8x128xf32>
    %220 = arith.mulf %219, %206 : vector<8x128xf32>
    %221 = arith.index_cast %arg0 : i32 to index
    %c17 = arith.constant 17 : index
    %222 = memref.load %arg2[%221, %c17] : memref<1x55xf32, #tpu.memory_space<smem>>
    %223 = vector.broadcast %222 : f32 to vector<8x128xf32>
    %224 = arith.addf %220, %223 : vector<8x128xf32>
    %225 = arith.mulf %224, %206 : vector<8x128xf32>
    %226 = arith.index_cast %arg0 : i32 to index
    %c6 = arith.constant 6 : index
    %227 = memref.load %arg2[%226, %c6] : memref<1x55xf32, #tpu.memory_space<smem>>
    %228 = vector.broadcast %227 : f32 to vector<8x128xf32>
    %229 = arith.addf %225, %228 : vector<8x128xf32>
    %230 = arith.mulf %204, %229 : vector<8x128xf32>
    %231 = arith.mulf %205, %229 : vector<8x128xf32>
    %232 = arith.addf %199, %230 : vector<8x128xf32>
    %233 = arith.addf %200, %231 : vector<8x128xf32>
    %c249_i32 = arith.constant 249 : i32
    %234 = tpu.dynamic_rotate %1 by %c249_i32 dim 1 : vector<8x256xf32>, i32 -> vector<8x256xf32>
    %c249_i32_20 = arith.constant 249 : i32
    %235 = tpu.dynamic_rotate %3 by %c249_i32_20 dim 1 : vector<8x256xf32>, i32 -> vector<8x256xf32>
    %c249_i32_21 = arith.constant 249 : i32
    %236 = tpu.dynamic_rotate %7 by %c249_i32_21 dim 1 : vector<8x256xf32>, i32 -> vector<8x256xf32>
    %237 = vector.extract_strided_slice %234 {offsets = [0, 0], sizes = [8, 128], strides = [1, 1]} : vector<8x256xf32> to vector<8x128xf32>
    %238 = vector.extract_strided_slice %235 {offsets = [0, 0], sizes = [8, 128], strides = [1, 1]} : vector<8x256xf32> to vector<8x128xf32>
    %239 = vector.extract_strided_slice %236 {offsets = [0, 0], sizes = [8, 128], strides = [1, 1]} : vector<8x256xf32> to vector<8x128xf32>
    %240 = arith.index_cast %arg0 : i32 to index
    %c51 = arith.constant 51 : index
    %241 = memref.load %arg2[%240, %c51] : memref<1x55xf32, #tpu.memory_space<smem>>
    %242 = vector.broadcast %241 : f32 to vector<8x128xf32>
    %243 = arith.mulf %242, %239 : vector<8x128xf32>
    %244 = arith.index_cast %arg0 : i32 to index
    %c40 = arith.constant 40 : index
    %245 = memref.load %arg2[%244, %c40] : memref<1x55xf32, #tpu.memory_space<smem>>
    %246 = vector.broadcast %245 : f32 to vector<8x128xf32>
    %247 = arith.addf %243, %246 : vector<8x128xf32>
    %248 = arith.mulf %247, %239 : vector<8x128xf32>
    %249 = arith.index_cast %arg0 : i32 to index
    %c29 = arith.constant 29 : index
    %250 = memref.load %arg2[%249, %c29] : memref<1x55xf32, #tpu.memory_space<smem>>
    %251 = vector.broadcast %250 : f32 to vector<8x128xf32>
    %252 = arith.addf %248, %251 : vector<8x128xf32>
    %253 = arith.mulf %252, %239 : vector<8x128xf32>
    %254 = arith.index_cast %arg0 : i32 to index
    %c18 = arith.constant 18 : index
    %255 = memref.load %arg2[%254, %c18] : memref<1x55xf32, #tpu.memory_space<smem>>
    %256 = vector.broadcast %255 : f32 to vector<8x128xf32>
    %257 = arith.addf %253, %256 : vector<8x128xf32>
    %258 = arith.mulf %257, %239 : vector<8x128xf32>
    %259 = arith.index_cast %arg0 : i32 to index
    %c7 = arith.constant 7 : index
    %260 = memref.load %arg2[%259, %c7] : memref<1x55xf32, #tpu.memory_space<smem>>
    %261 = vector.broadcast %260 : f32 to vector<8x128xf32>
    %262 = arith.addf %258, %261 : vector<8x128xf32>
    %263 = arith.mulf %237, %262 : vector<8x128xf32>
    %264 = arith.mulf %238, %262 : vector<8x128xf32>
    %265 = arith.addf %232, %263 : vector<8x128xf32>
    %266 = arith.addf %233, %264 : vector<8x128xf32>
    %c248_i32 = arith.constant 248 : i32
    %267 = tpu.dynamic_rotate %1 by %c248_i32 dim 1 : vector<8x256xf32>, i32 -> vector<8x256xf32>
    %c248_i32_22 = arith.constant 248 : i32
    %268 = tpu.dynamic_rotate %3 by %c248_i32_22 dim 1 : vector<8x256xf32>, i32 -> vector<8x256xf32>
    %c248_i32_23 = arith.constant 248 : i32
    %269 = tpu.dynamic_rotate %7 by %c248_i32_23 dim 1 : vector<8x256xf32>, i32 -> vector<8x256xf32>
    %270 = vector.extract_strided_slice %267 {offsets = [0, 0], sizes = [8, 128], strides = [1, 1]} : vector<8x256xf32> to vector<8x128xf32>
    %271 = vector.extract_strided_slice %268 {offsets = [0, 0], sizes = [8, 128], strides = [1, 1]} : vector<8x256xf32> to vector<8x128xf32>
    %272 = vector.extract_strided_slice %269 {offsets = [0, 0], sizes = [8, 128], strides = [1, 1]} : vector<8x256xf32> to vector<8x128xf32>
    %273 = arith.index_cast %arg0 : i32 to index
    %c52 = arith.constant 52 : index
    %274 = memref.load %arg2[%273, %c52] : memref<1x55xf32, #tpu.memory_space<smem>>
    %275 = vector.broadcast %274 : f32 to vector<8x128xf32>
    %276 = arith.mulf %275, %272 : vector<8x128xf32>
    %277 = arith.index_cast %arg0 : i32 to index
    %c41 = arith.constant 41 : index
    %278 = memref.load %arg2[%277, %c41] : memref<1x55xf32, #tpu.memory_space<smem>>
    %279 = vector.broadcast %278 : f32 to vector<8x128xf32>
    %280 = arith.addf %276, %279 : vector<8x128xf32>
    %281 = arith.mulf %280, %272 : vector<8x128xf32>
    %282 = arith.index_cast %arg0 : i32 to index
    %c30 = arith.constant 30 : index
    %283 = memref.load %arg2[%282, %c30] : memref<1x55xf32, #tpu.memory_space<smem>>
    %284 = vector.broadcast %283 : f32 to vector<8x128xf32>
    %285 = arith.addf %281, %284 : vector<8x128xf32>
    %286 = arith.mulf %285, %272 : vector<8x128xf32>
    %287 = arith.index_cast %arg0 : i32 to index
    %c19 = arith.constant 19 : index
    %288 = memref.load %arg2[%287, %c19] : memref<1x55xf32, #tpu.memory_space<smem>>
    %289 = vector.broadcast %288 : f32 to vector<8x128xf32>
    %290 = arith.addf %286, %289 : vector<8x128xf32>
    %291 = arith.mulf %290, %272 : vector<8x128xf32>
    %292 = arith.index_cast %arg0 : i32 to index
    %c8 = arith.constant 8 : index
    %293 = memref.load %arg2[%292, %c8] : memref<1x55xf32, #tpu.memory_space<smem>>
    %294 = vector.broadcast %293 : f32 to vector<8x128xf32>
    %295 = arith.addf %291, %294 : vector<8x128xf32>
    %296 = arith.mulf %270, %295 : vector<8x128xf32>
    %297 = arith.mulf %271, %295 : vector<8x128xf32>
    %298 = arith.addf %265, %296 : vector<8x128xf32>
    %299 = arith.addf %266, %297 : vector<8x128xf32>
    %c247_i32 = arith.constant 247 : i32
    %300 = tpu.dynamic_rotate %1 by %c247_i32 dim 1 : vector<8x256xf32>, i32 -> vector<8x256xf32>
    %c247_i32_24 = arith.constant 247 : i32
    %301 = tpu.dynamic_rotate %3 by %c247_i32_24 dim 1 : vector<8x256xf32>, i32 -> vector<8x256xf32>
    %c247_i32_25 = arith.constant 247 : i32
    %302 = tpu.dynamic_rotate %7 by %c247_i32_25 dim 1 : vector<8x256xf32>, i32 -> vector<8x256xf32>
    %303 = vector.extract_strided_slice %300 {offsets = [0, 0], sizes = [8, 128], strides = [1, 1]} : vector<8x256xf32> to vector<8x128xf32>
    %304 = vector.extract_strided_slice %301 {offsets = [0, 0], sizes = [8, 128], strides = [1, 1]} : vector<8x256xf32> to vector<8x128xf32>
    %305 = vector.extract_strided_slice %302 {offsets = [0, 0], sizes = [8, 128], strides = [1, 1]} : vector<8x256xf32> to vector<8x128xf32>
    %306 = arith.index_cast %arg0 : i32 to index
    %c53 = arith.constant 53 : index
    %307 = memref.load %arg2[%306, %c53] : memref<1x55xf32, #tpu.memory_space<smem>>
    %308 = vector.broadcast %307 : f32 to vector<8x128xf32>
    %309 = arith.mulf %308, %305 : vector<8x128xf32>
    %310 = arith.index_cast %arg0 : i32 to index
    %c42 = arith.constant 42 : index
    %311 = memref.load %arg2[%310, %c42] : memref<1x55xf32, #tpu.memory_space<smem>>
    %312 = vector.broadcast %311 : f32 to vector<8x128xf32>
    %313 = arith.addf %309, %312 : vector<8x128xf32>
    %314 = arith.mulf %313, %305 : vector<8x128xf32>
    %315 = arith.index_cast %arg0 : i32 to index
    %c31 = arith.constant 31 : index
    %316 = memref.load %arg2[%315, %c31] : memref<1x55xf32, #tpu.memory_space<smem>>
    %317 = vector.broadcast %316 : f32 to vector<8x128xf32>
    %318 = arith.addf %314, %317 : vector<8x128xf32>
    %319 = arith.mulf %318, %305 : vector<8x128xf32>
    %320 = arith.index_cast %arg0 : i32 to index
    %c20 = arith.constant 20 : index
    %321 = memref.load %arg2[%320, %c20] : memref<1x55xf32, #tpu.memory_space<smem>>
    %322 = vector.broadcast %321 : f32 to vector<8x128xf32>
    %323 = arith.addf %319, %322 : vector<8x128xf32>
    %324 = arith.mulf %323, %305 : vector<8x128xf32>
    %325 = arith.index_cast %arg0 : i32 to index
    %c9 = arith.constant 9 : index
    %326 = memref.load %arg2[%325, %c9] : memref<1x55xf32, #tpu.memory_space<smem>>
    %327 = vector.broadcast %326 : f32 to vector<8x128xf32>
    %328 = arith.addf %324, %327 : vector<8x128xf32>
    %329 = arith.mulf %303, %328 : vector<8x128xf32>
    %330 = arith.mulf %304, %328 : vector<8x128xf32>
    %331 = arith.addf %298, %329 : vector<8x128xf32>
    %332 = arith.addf %299, %330 : vector<8x128xf32>
    %c246_i32 = arith.constant 246 : i32
    %333 = tpu.dynamic_rotate %1 by %c246_i32 dim 1 : vector<8x256xf32>, i32 -> vector<8x256xf32>
    %c246_i32_26 = arith.constant 246 : i32
    %334 = tpu.dynamic_rotate %3 by %c246_i32_26 dim 1 : vector<8x256xf32>, i32 -> vector<8x256xf32>
    %c246_i32_27 = arith.constant 246 : i32
    %335 = tpu.dynamic_rotate %7 by %c246_i32_27 dim 1 : vector<8x256xf32>, i32 -> vector<8x256xf32>
    %336 = vector.extract_strided_slice %333 {offsets = [0, 0], sizes = [8, 128], strides = [1, 1]} : vector<8x256xf32> to vector<8x128xf32>
    %337 = vector.extract_strided_slice %334 {offsets = [0, 0], sizes = [8, 128], strides = [1, 1]} : vector<8x256xf32> to vector<8x128xf32>
    %338 = vector.extract_strided_slice %335 {offsets = [0, 0], sizes = [8, 128], strides = [1, 1]} : vector<8x256xf32> to vector<8x128xf32>
    %339 = arith.index_cast %arg0 : i32 to index
    %c54 = arith.constant 54 : index
    %340 = memref.load %arg2[%339, %c54] : memref<1x55xf32, #tpu.memory_space<smem>>
    %341 = vector.broadcast %340 : f32 to vector<8x128xf32>
    %342 = arith.mulf %341, %338 : vector<8x128xf32>
    %343 = arith.index_cast %arg0 : i32 to index
    %c43 = arith.constant 43 : index
    %344 = memref.load %arg2[%343, %c43] : memref<1x55xf32, #tpu.memory_space<smem>>
    %345 = vector.broadcast %344 : f32 to vector<8x128xf32>
    %346 = arith.addf %342, %345 : vector<8x128xf32>
    %347 = arith.mulf %346, %338 : vector<8x128xf32>
    %348 = arith.index_cast %arg0 : i32 to index
    %c32 = arith.constant 32 : index
    %349 = memref.load %arg2[%348, %c32] : memref<1x55xf32, #tpu.memory_space<smem>>
    %350 = vector.broadcast %349 : f32 to vector<8x128xf32>
    %351 = arith.addf %347, %350 : vector<8x128xf32>
    %352 = arith.mulf %351, %338 : vector<8x128xf32>
    %353 = arith.index_cast %arg0 : i32 to index
    %c21 = arith.constant 21 : index
    %354 = memref.load %arg2[%353, %c21] : memref<1x55xf32, #tpu.memory_space<smem>>
    %355 = vector.broadcast %354 : f32 to vector<8x128xf32>
    %356 = arith.addf %352, %355 : vector<8x128xf32>
    %357 = arith.mulf %356, %338 : vector<8x128xf32>
    %358 = arith.index_cast %arg0 : i32 to index
    %c10 = arith.constant 10 : index
    %359 = memref.load %arg2[%358, %c10] : memref<1x55xf32, #tpu.memory_space<smem>>
    %360 = vector.broadcast %359 : f32 to vector<8x128xf32>
    %361 = arith.addf %357, %360 : vector<8x128xf32>
    %362 = arith.mulf %336, %361 : vector<8x128xf32>
    %363 = arith.mulf %337, %361 : vector<8x128xf32>
    %364 = arith.addf %331, %362 : vector<8x128xf32>
    %365 = arith.addf %332, %363 : vector<8x128xf32>
    %c0_28 = arith.constant 0 : index
    %c0_29 = arith.constant 0 : index
    %c0_30 = arith.constant 0 : index
    %c0_31 = arith.constant 0 : index
    %366 = vector.load %arg4[%c0_28, %c0_29, %c0_30, %c0_31] : memref<1x2x8x128xf32, #tpu.memory_space<vmem>>, vector<1x1x8x128xf32>
    %367 = vector.shape_cast %366 : vector<1x1x8x128xf32> to vector<8x128xf32>
    %368 = vector.shape_cast %364 : vector<8x128xf32> to vector<1x1x8x128xf32>
    tpu.vector_store %arg4[%c0_28, %c0_29, %c0_30, %c0_31], %368 {strides = array<i32>} : memref<1x2x8x128xf32, #tpu.memory_space<vmem>>, vector<1x1x8x128xf32>,
    %c0_32 = arith.constant 0 : index
    %c1_33 = arith.constant 1 : index
    %c0_34 = arith.constant 0 : index
    %c0_35 = arith.constant 0 : index
    %369 = vector.load %arg4[%c0_32, %c1_33, %c0_34, %c0_35] : memref<1x2x8x128xf32, #tpu.memory_space<vmem>>, vector<1x1x8x128xf32>
    %370 = vector.shape_cast %369 : vector<1x1x8x128xf32> to vector<8x128xf32>
    %371 = vector.shape_cast %365 : vector<8x128xf32> to vector<1x1x8x128xf32>
    tpu.vector_store %arg4[%c0_32, %c1_33, %c0_34, %c0_35], %371 {strides = array<i32>} : memref<1x2x8x128xf32, #tpu.memory_space<vmem>>, vector<1x1x8x128xf32>,
    return
  }
  func.func @transform_0(%arg0: i32, %arg1: i32) -> (i32, i32) {
    %c0_i32 = arith.constant 0 : i32
    %c0_i32_0 = arith.constant 0 : i32
    %c0_i32_1 = arith.constant 0 : i32
    return %c0_i32, %c0_i32_0 : i32, i32
  }
  func.func @transform_1(%arg0: i32, %arg1: i32) -> (i32, i32, i32, i32) {
    %c0_i32 = arith.constant 0 : i32
    %c0_i32_0 = arith.constant 0 : i32
    %c0_i32_1 = arith.constant 0 : i32
    return %arg0, %c0_i32, %arg1, %c0_i32_0 : i32, i32, i32, i32
  }
  func.func @transform_2(%arg0: i32, %arg1: i32) -> (i32, i32, i32, i32) {
    %c0_i32 = arith.constant 0 : i32
    %c0_i32_0 = arith.constant 0 : i32
    %c0_i32_1 = arith.constant 0 : i32
    return %arg0, %c0_i32, %arg1, %c0_i32_0 : i32, i32, i32, i32
  }
}

</mosaic_0001>

<llo_original>
// kernel: tpu_custom_call.1
$region0: #{tpu_custom_call.1}
  #allocation0 [shape = 'u32[]', space=smem, size = 0x4, offset = 0x4, fixed_abs, tag = 'smem constant byte address 0x4 - core index']
  #allocation1 [shape = 'u32[72,128]{1,0:T(1,128)}', space=vmem, size = 0x9000, scoped, tag = 'internal scratch']
  %s0 = inlined_call_operand.hbm [shape: f32[1,55], index: 0, kind: input, shape index: {}]
  %s1 = inlined_call_operand.hbm [shape: f32[1,2,8,256], index: 1, kind: input, shape index: {}]
  %s2 = inlined_call_operand.hbm [shape: f32[1,2,8,128], index: 2, kind: output, shape index: {}]
  %s3 = sld [smem:[#allocation0]]
  $region26: #{tpu_custom_call.1} parent=0
    _
  %s5 = ssub.s32 1, %s3
  %s6 = scalar_select 0, %s5, %s3
  $region1: #{tpu_custom_call.1} parent=0
    #allocation2 [shape = 'u8[512]{0}', space=smem, size = 0x200, scoped, tag = 'input window, operand 0, single buffered']
    #allocation3 [shape = 's32[1]{0}', space=sflag, size = 0x4, scoped, tag = 'scoped memory for tpu_custom_call.1']
    #allocation4 [shape = 's32[1]{0}', space=sflag, size = 0x4, scoped, tag = 'scoped memory for tpu_custom_call.1']
    #allocation5 [shape = 's32[1]{0}', space=sflag, size = 0x4, scoped, tag = 'scoped memory for tpu_custom_call.1']
    #allocation6 [shape = 'u8[16384]{0}', space=vmem, size = 0x4000, scoped, tag = 'input window, operand 1, single buffered']
    #allocation7 [shape = 'u8[8192]{0}', space=vmem, size = 0x2000, scoped, tag = 'output window, operand 0, single buffered']
    %7 = vsyncpa [#allocation5], 0
    %8 = vsyncpa [#allocation3], 0
    %9 = vsyncpa [#allocation4], 0
    // Predicated region
    $region2: #{tpu_custom_call.1} parent=1 // pred_check
      _
    $region3: #{tpu_custom_call.1} parent=1 // pred_check_branch
      %11 = sbr.rel (0) target = $region5
    $region4: #{tpu_custom_call.1} parent=1 // pred_region
      %13 = vsyncadd [#allocation5], 0
      %s15 = sshll.u32 %s0, 4
      %s16 = int_to_ptr.hbm [resolvable:$true] %s15
      %18 = dma.hbm_to_smem %s16, 16, [#allocation2], [#allocation5]
    $region5: #{tpu_custom_call.1} parent=1 // pred_fallthru
      _
    // Predicated region
    $region6: #{tpu_custom_call.1} parent=1 // pred_check
      _
    $region7: #{tpu_custom_call.1} parent=1 // pred_check_branch
      %20 = sbr.rel (0) target = $region9
    $region8: #{tpu_custom_call.1} parent=1 // pred_region
      %22 = vsyncadd [#allocation3], 0
      %s23 = sshll.u32 %s1, 4
      %s24 = int_to_ptr.hbm [resolvable:$true] %s23
      %s25 = sshll.u32 [#allocation6], 4
      %s26 = int_to_ptr.vmem [resolvable:$true] %s25
      %31 = dma.hbm_to_vmem [thread:$0]  %s24, 512, %s26, [#allocation3], 256, 256, 16
    $region9: #{tpu_custom_call.1} parent=1 // pred_fallthru
      _
    // Predicated region
    $region10: #{tpu_custom_call.1} parent=1 // pred_check
      _
    $region11: #{tpu_custom_call.1} parent=1 // pred_check_branch
      %33 = sbr.rel (0) target = $region13
    $region12: #{tpu_custom_call.1} parent=1 // pred_region
      %35 = dma.done [#allocation5], 16
    $region13: #{tpu_custom_call.1} parent=1 // pred_fallthru
      _
    // Predicated region
    $region14: #{tpu_custom_call.1} parent=1 // pred_check
      _
    $region15: #{tpu_custom_call.1} parent=1 // pred_check_branch
      %37 = sbr.rel (0) target = $region17
    $region16: #{tpu_custom_call.1} parent=1 // pred_region
      %39 = dma.done [#allocation3], 512
    $region17: #{tpu_custom_call.1} parent=1 // pred_fallthru
      _
    %40 = sfence
    %v41 = vld [vmem:[#allocation6] sm:$0xff]
    %v42 = vld [vmem:[#allocation6 + $0x8] sm:$0xff]
    %s43 = scalar_lea.vmem [#allocation6], 16
    %v44 = vld [vmem:[%s43] sm:$0xff]
    %v45 = vld [vmem:[%s43 + $0x8] sm:$0xff]
    %v46 = vmul.f32 %v41, %v41
    %v47 = vmul.f32 %v42, %v42
    %v48 = vmul.f32 %v44, %v44
    %v49 = vmul.f32 %v45, %v45
    %v50 = vadd.f32 %v46, %v48
    %v51 = vadd.f32 %v47, %v49
    %v52 = vrsqrt.pop %v50
    %v53 = vmul.f32 %v52, %v50
    %v54 = vmul.f32 %v53, %v52
    %v55 = vmul.f32 0.5, %v54
    %v56 = vsub.f32 1.5, %v55
    %v57 = vmul.f32 %v52, %v56
    %v58 = vmul.f32 %v50, %v57
    %vm59 = vcmp.eq.f32.partialorder %v50, inf
    %v60 = vsel %vm59, %v50, %v58
    %vm61 = vcmp.eq.f32.partialorder %v50, 0.0
    %v62 = vand.u32 %v50, 2147483648
    %v63 = vsel %vm61, %v62, %v60
    %v64 = vrsqrt.pop %v51
    %v65 = vmul.f32 %v64, %v51
    %v66 = vmul.f32 %v65, %v64
    %v67 = vmul.f32 0.5, %v66
    %v68 = vsub.f32 1.5, %v67
    %v69 = vmul.f32 %v64, %v68
    %v70 = vmul.f32 %v51, %v69
    %vm71 = vcmp.eq.f32.partialorder %v51, inf
    %v72 = vsel %vm71, %v51, %v70
    %vm73 = vcmp.eq.f32.partialorder %v51, 0.0
    %v74 = vand.u32 %v51, 2147483648
    %v75 = vsel %vm73, %v74, %v72
    %s76 = smul.u32 0, 128
    %s77 = sadd.s32 %s76, 44
    %s78 = sld [smem:[#allocation2 + %s77]]
    %v79 = vstv %s78
    %v80 = vmul.f32 %v79, %v63
    %s81 = sadd.s32 %s76, 33
    %s82 = sld [smem:[#allocation2 + %s81]]
    %v83 = vstv %s82
    %v84 = vadd.f32 %v80, %v83
    %v85 = vmul.f32 %v84, %v63
    %s86 = sadd.s32 %s76, 22
    %s87 = sld [smem:[#allocation2 + %s86]]
    %v88 = vstv %s87
    %v89 = vadd.f32 %v85, %v88
    %v90 = vmul.f32 %v89, %v63
    %s91 = sadd.s32 %s76, 11
    %s92 = sld [smem:[#allocation2 + %s91]]
    %v93 = vstv %s92
    %v94 = vadd.f32 %v90, %v93
    %v95 = vmul.f32 %v94, %v63
    %s96 = sld [smem:[#allocation2 + %s76]]
    %v97 = vstv %s96
    %v98 = vadd.f32 %v95, %v97
    %v99 = vmul.f32 %v41, %v98
    %v100 = vmul.f32 %v44, %v98
    %101 = vrot.lane.b32.xlu0 %v41, 127
    %v102 = vpop.permute.xlu0 %101
    %103 = vrot.lane.b32.xlu0 %v42, 127
    %v104 = vpop.permute.xlu0 %103
    %v105 = vlaneseq
    %v106 = vand.u32 %v105, 127
    %vm107 = vcmp.lt.s32.totalorder %v106, 127
    %v108 = vsel %vm107, %v102, %v104
    %109 = vrot.lane.b32.xlu0 %v44, 127
    %v110 = vpop.permute.xlu0 %109
    %111 = vrot.lane.b32.xlu0 %v45, 127
    %v112 = vpop.permute.xlu0 %111
    %v113 = vsel %vm107, %v110, %v112
    %114 = vrot.lane.b32.xlu0 %v63, 127
    %v115 = vpop.permute.xlu0 %114
    %116 = vrot.lane.b32.xlu0 %v75, 127
    %v117 = vpop.permute.xlu0 %116
    %v118 = vsel %vm107, %v115, %v117
    %s119 = sadd.s32 %s76, 45
    %s120 = sld [smem:[#allocation2 + %s119]]
    %v121 = vstv %s120
    %v122 = vmul.f32 %v121, %v118
    %s123 = sadd.s32 %s76, 34
    %s124 = sld [smem:[#allocation2 + %s123]]
    %v125 = vstv %s124
    %v126 = vadd.f32 %v122, %v125
    %v127 = vmul.f32 %v126, %v118
    %s128 = sadd.s32 %s76, 23
    %s129 = sld [smem:[#allocation2 + %s128]]
    %v130 = vstv %s129
    %v131 = vadd.f32 %v127, %v130
    %v132 = vmul.f32 %v131, %v118
    %s133 = sadd.s32 %s76, 12
    %s134 = sld [smem:[#allocation2 + %s133]]
    %v135 = vstv %s134
    %v136 = vadd.f32 %v132, %v135
    %v137 = vmul.f32 %v136, %v118
    %s138 = sadd.s32 %s76, 1
    %s139 = sld [smem:[#allocation2 + %s138]]
    %v140 = vstv %s139
    %v141 = vadd.f32 %v137, %v140
    %v142 = vmul.f32 %v108, %v141
    %v143 = vmul.f32 %v113, %v141
    %v144 = vadd.f32 %v99, %v142
    %v145 = vadd.f32 %v100, %v143
    %146 = vrot.lane.b32.xlu0 %v41, 126
    %v147 = vpop.permute.xlu0 %146
    %148 = vrot.lane.b32.xlu0 %v42, 126
    %v149 = vpop.permute.xlu0 %148
    %vm150 = vcmp.lt.s32.totalorder %v106, 126
    %v151 = vsel %vm150, %v147, %v149
    %152 = vrot.lane.b32.xlu0 %v44, 126
    %v153 = vpop.permute.xlu0 %152
    %154 = vrot.lane.b32.xlu0 %v45, 126
    %v155 = vpop.permute.xlu0 %154
    %v156 = vsel %vm150, %v153, %v155
    %157 = vrot.lane.b32.xlu0 %v63, 126
    %v158 = vpop.permute.xlu0 %157
    %159 = vrot.lane.b32.xlu0 %v75, 126
    %v160 = vpop.permute.xlu0 %159
    %v161 = vsel %vm150, %v158, %v160
    %s162 = sadd.s32 %s76, 46
    %s163 = sld [smem:[#allocation2 + %s162]]
    %v164 = vstv %s163
    %v165 = vmul.f32 %v164, %v161
    %s166 = sadd.s32 %s76, 35
    %s167 = sld [smem:[#allocation2 + %s166]]
    %v168 = vstv %s167
    %v169 = vadd.f32 %v165, %v168
    %v170 = vmul.f32 %v169, %v161
    %s171 = sadd.s32 %s76, 24
    %s172 = sld [smem:[#allocation2 + %s171]]
    %v173 = vstv %s172
    %v174 = vadd.f32 %v170, %v173
    %v175 = vmul.f32 %v174, %v161
    %s176 = sadd.s32 %s76, 13
    %s177 = sld [smem:[#allocation2 + %s176]]
    %v178 = vstv %s177
    %v179 = vadd.f32 %v175, %v178
    %v180 = vmul.f32 %v179, %v161
    %s181 = sadd.s32 %s76, 2
    %s182 = sld [smem:[#allocation2 + %s181]]
    %v183 = vstv %s182
    %v184 = vadd.f32 %v180, %v183
    %v185 = vmul.f32 %v151, %v184
    %v186 = vmul.f32 %v156, %v184
    %v187 = vadd.f32 %v144, %v185
    %v188 = vadd.f32 %v145, %v186
    %189 = vrot.lane.b32.xlu0 %v41, 125
    %v190 = vpop.permute.xlu0 %189
    %191 = vrot.lane.b32.xlu0 %v42, 125
    %v192 = vpop.permute.xlu0 %191
    %vm193 = vcmp.lt.s32.totalorder %v106, 125
    %v194 = vsel %vm193, %v190, %v192
    %195 = vrot.lane.b32.xlu0 %v44, 125
    %v196 = vpop.permute.xlu0 %195
    %197 = vrot.lane.b32.xlu0 %v45, 125
    %v198 = vpop.permute.xlu0 %197
    %v199 = vsel %vm193, %v196, %v198
    %200 = vrot.lane.b32.xlu0 %v63, 125
    %v201 = vpop.permute.xlu0 %200
    %202 = vrot.lane.b32.xlu0 %v75, 125
    %v203 = vpop.permute.xlu0 %202
    %v204 = vsel %vm193, %v201, %v203
    %s205 = sadd.s32 %s76, 47
    %s206 = sld [smem:[#allocation2 + %s205]]
    %v207 = vstv %s206
    %v208 = vmul.f32 %v207, %v204
    %s209 = sadd.s32 %s76, 36
    %s210 = sld [smem:[#allocation2 + %s209]]
    %v211 = vstv %s210
    %v212 = vadd.f32 %v208, %v211
    %v213 = vmul.f32 %v212, %v204
    %s214 = sadd.s32 %s76, 25
    %s215 = sld [smem:[#allocation2 + %s214]]
    %v216 = vstv %s215
    %v217 = vadd.f32 %v213, %v216
    %v218 = vmul.f32 %v217, %v204
    %s219 = sadd.s32 %s76, 14
    %s220 = sld [smem:[#allocation2 + %s219]]
    %v221 = vstv %s220
    %v222 = vadd.f32 %v218, %v221
    %v223 = vmul.f32 %v222, %v204
    %s224 = sadd.s32 %s76, 3
    %s225 = sld [smem:[#allocation2 + %s224]]
    %v226 = vstv %s225
    %v227 = vadd.f32 %v223, %v226
    %v228 = vmul.f32 %v194, %v227
    %v229 = vmul.f32 %v199, %v227
    %v230 = vadd.f32 %v187, %v228
    %v231 = vadd.f32 %v188, %v229
    %232 = vrot.lane.b32.xlu0 %v41, 124
    %v233 = vpop.permute.xlu0 %232
    %234 = vrot.lane.b32.xlu0 %v42, 124
    %v235 = vpop.permute.xlu0 %234
    %vm236 = vcmp.lt.s32.totalorder %v106, 124
    %v237 = vsel %vm236, %v233, %v235
    %238 = vrot.lane.b32.xlu0 %v44, 124
    %v239 = vpop.permute.xlu0 %238
    %240 = vrot.lane.b32.xlu0 %v45, 124
    %v241 = vpop.permute.xlu0 %240
    %v242 = vsel %vm236, %v239, %v241
    %243 = vrot.lane.b32.xlu0 %v63, 124
    %v244 = vpop.permute.xlu0 %243
    %245 = vrot.lane.b32.xlu0 %v75, 124
    %v246 = vpop.permute.xlu0 %245
    %v247 = vsel %vm236, %v244, %v246
    %s248 = sadd.s32 %s76, 48
    %s249 = sld [smem:[#allocation2 + %s248]]
    %v250 = vstv %s249
    %v251 = vmul.f32 %v250, %v247
    %s252 = sadd.s32 %s76, 37
    %s253 = sld [smem:[#allocation2 + %s252]]
    %v254 = vstv %s253
    %v255 = vadd.f32 %v251, %v254
    %v256 = vmul.f32 %v255, %v247
    %s257 = sadd.s32 %s76, 26
    %s258 = sld [smem:[#allocation2 + %s257]]
    %v259 = vstv %s258
    %v260 = vadd.f32 %v256, %v259
    %v261 = vmul.f32 %v260, %v247
    %s262 = sadd.s32 %s76, 15
    %s263 = sld [smem:[#allocation2 + %s262]]
    %v264 = vstv %s263
    %v265 = vadd.f32 %v261, %v264
    %v266 = vmul.f32 %v265, %v247
    %s267 = sadd.s32 %s76, 4
    %s268 = sld [smem:[#allocation2 + %s267]]
    %v269 = vstv %s268
    %v270 = vadd.f32 %v266, %v269
    %v271 = vmul.f32 %v237, %v270
    %v272 = vmul.f32 %v242, %v270
    %v273 = vadd.f32 %v230, %v271
    %v274 = vadd.f32 %v231, %v272
    %275 = vrot.lane.b32.xlu0 %v41, 123
    %v276 = vpop.permute.xlu0 %275
    %277 = vrot.lane.b32.xlu0 %v42, 123
    %v278 = vpop.permute.xlu0 %277
    %vm279 = vcmp.lt.s32.totalorder %v106, 123
    %v280 = vsel %vm279, %v276, %v278
    %281 = vrot.lane.b32.xlu0 %v44, 123
    %v282 = vpop.permute.xlu0 %281
    %283 = vrot.lane.b32.xlu0 %v45, 123
    %v284 = vpop.permute.xlu0 %283
    %v285 = vsel %vm279, %v282, %v284
    %286 = vrot.lane.b32.xlu0 %v63, 123
    %v287 = vpop.permute.xlu0 %286
    %288 = vrot.lane.b32.xlu0 %v75, 123
    %v289 = vpop.permute.xlu0 %288
    %v290 = vsel %vm279, %v287, %v289
    %s291 = sadd.s32 %s76, 49
    %s292 = sld [smem:[#allocation2 + %s291]]
    %v293 = vstv %s292
    %v294 = vmul.f32 %v293, %v290
    %s295 = sadd.s32 %s76, 38
    %s296 = sld [smem:[#allocation2 + %s295]]
    %v297 = vstv %s296
    %v298 = vadd.f32 %v294, %v297
    %v299 = vmul.f32 %v298, %v290
    %s300 = sadd.s32 %s76, 27
    %s301 = sld [smem:[#allocation2 + %s300]]
    %v302 = vstv %s301
    %v303 = vadd.f32 %v299, %v302
    %v304 = vmul.f32 %v303, %v290
    %s305 = sadd.s32 %s76, 16
    %s306 = sld [smem:[#allocation2 + %s305]]
    %v307 = vstv %s306
    %v308 = vadd.f32 %v304, %v307
    %v309 = vmul.f32 %v308, %v290
    %s310 = sadd.s32 %s76, 5
    %s311 = sld [smem:[#allocation2 + %s310]]
    %v312 = vstv %s311
    %v313 = vadd.f32 %v309, %v312
    %v314 = vmul.f32 %v280, %v313
    %v315 = vmul.f32 %v285, %v313
    %v316 = vadd.f32 %v273, %v314
    %v317 = vadd.f32 %v274, %v315
    %318 = vrot.lane.b32.xlu0 %v41, 122
    %v319 = vpop.permute.xlu0 %318
    %320 = vrot.lane.b32.xlu0 %v42, 122
    %v321 = vpop.permute.xlu0 %320
    %vm322 = vcmp.lt.s32.totalorder %v106, 122
    %v323 = vsel %vm322, %v319, %v321
    %324 = vrot.lane.b32.xlu0 %v44, 122
    %v325 = vpop.permute.xlu0 %324
    %326 = vrot.lane.b32.xlu0 %v45, 122
    %v327 = vpop.permute.xlu0 %326
    %v328 = vsel %vm322, %v325, %v327
    %329 = vrot.lane.b32.xlu0 %v63, 122
    %v330 = vpop.permute.xlu0 %329
    %331 = vrot.lane.b32.xlu0 %v75, 122
    %v332 = vpop.permute.xlu0 %331
    %v333 = vsel %vm322, %v330, %v332
    %s334 = sadd.s32 %s76, 50
    %s335 = sld [smem:[#allocation2 + %s334]]
    %v336 = vstv %s335
    %v337 = vmul.f32 %v336, %v333
    %s338 = sadd.s32 %s76, 39
    %s339 = sld [smem:[#allocation2 + %s338]]
    %v340 = vstv %s339
    %v341 = vadd.f32 %v337, %v340
    %v342 = vmul.f32 %v341, %v333
    %s343 = sadd.s32 %s76, 28
    %s344 = sld [smem:[#allocation2 + %s343]]
    %v345 = vstv %s344
    %v346 = vadd.f32 %v342, %v345
    %v347 = vmul.f32 %v346, %v333
    %s348 = sadd.s32 %s76, 17
    %s349 = sld [smem:[#allocation2 + %s348]]
    %v350 = vstv %s349
    %v351 = vadd.f32 %v347, %v350
    %v352 = vmul.f32 %v351, %v333
    %s353 = sadd.s32 %s76, 6
    %s354 = sld [smem:[#allocation2 + %s353]]
    %v355 = vstv %s354
    %v356 = vadd.f32 %v352, %v355
    %v357 = vmul.f32 %v323, %v356
    %v358 = vmul.f32 %v328, %v356
    %v359 = vadd.f32 %v316, %v357
    %v360 = vadd.f32 %v317, %v358
    %361 = vrot.lane.b32.xlu0 %v41, 121
    %v362 = vpop.permute.xlu0 %361
    %363 = vrot.lane.b32.xlu0 %v42, 121
    %v364 = vpop.permute.xlu0 %363
    %vm365 = vcmp.lt.s32.totalorder %v106, 121
    %v366 = vsel %vm365, %v362, %v364
    %367 = vrot.lane.b32.xlu0 %v44, 121
    %v368 = vpop.permute.xlu0 %367
    %369 = vrot.lane.b32.xlu0 %v45, 121
    %v370 = vpop.permute.xlu0 %369
    %v371 = vsel %vm365, %v368, %v370
    %372 = vrot.lane.b32.xlu0 %v63, 121
    %v373 = vpop.permute.xlu0 %372
    %374 = vrot.lane.b32.xlu0 %v75, 121
    %v375 = vpop.permute.xlu0 %374
    %v376 = vsel %vm365, %v373, %v375
    %s377 = sadd.s32 %s76, 51
    %s378 = sld [smem:[#allocation2 + %s377]]
    %v379 = vstv %s378
    %v380 = vmul.f32 %v379, %v376
    %s381 = sadd.s32 %s76, 40
    %s382 = sld [smem:[#allocation2 + %s381]]
    %v383 = vstv %s382
    %v384 = vadd.f32 %v380, %v383
    %v385 = vmul.f32 %v384, %v376
    %s386 = sadd.s32 %s76, 29
    %s387 = sld [smem:[#allocation2 + %s386]]
    %v388 = vstv %s387
    %v389 = vadd.f32 %v385, %v388
    %v390 = vmul.f32 %v389, %v376
    %s391 = sadd.s32 %s76, 18
    %s392 = sld [smem:[#allocation2 + %s391]]
    %v393 = vstv %s392
    %v394 = vadd.f32 %v390, %v393
    %v395 = vmul.f32 %v394, %v376
    %s396 = sadd.s32 %s76, 7
    %s397 = sld [smem:[#allocation2 + %s396]]
    %v398 = vstv %s397
    %v399 = vadd.f32 %v395, %v398
    %v400 = vmul.f32 %v366, %v399
    %v401 = vmul.f32 %v371, %v399
    %v402 = vadd.f32 %v359, %v400
    %v403 = vadd.f32 %v360, %v401
    %404 = vrot.lane.b32.xlu0 %v41, 120
    %v405 = vpop.permute.xlu0 %404
    %406 = vrot.lane.b32.xlu0 %v42, 120
    %v407 = vpop.permute.xlu0 %406
    %vm408 = vcmp.lt.s32.totalorder %v106, 120
    %v409 = vsel %vm408, %v405, %v407
    %410 = vrot.lane.b32.xlu0 %v44, 120
    %v411 = vpop.permute.xlu0 %410
    %412 = vrot.lane.b32.xlu0 %v45, 120
    %v413 = vpop.permute.xlu0 %412
    %v414 = vsel %vm408, %v411, %v413
    %415 = vrot.lane.b32.xlu0 %v63, 120
    %v416 = vpop.permute.xlu0 %415
    %417 = vrot.lane.b32.xlu0 %v75, 120
    %v418 = vpop.permute.xlu0 %417
    %v419 = vsel %vm408, %v416, %v418
    %s420 = sadd.s32 %s76, 52
    %s421 = sld [smem:[#allocation2 + %s420]]
    %v422 = vstv %s421
    %v423 = vmul.f32 %v422, %v419
    %s424 = sadd.s32 %s76, 41
    %s425 = sld [smem:[#allocation2 + %s424]]
    %v426 = vstv %s425
    %v427 = vadd.f32 %v423, %v426
    %v428 = vmul.f32 %v427, %v419
    %s429 = sadd.s32 %s76, 30
    %s430 = sld [smem:[#allocation2 + %s429]]
    %v431 = vstv %s430
    %v432 = vadd.f32 %v428, %v431
    %v433 = vmul.f32 %v432, %v419
    %s434 = sadd.s32 %s76, 19
    %s435 = sld [smem:[#allocation2 + %s434]]
    %v436 = vstv %s435
    %v437 = vadd.f32 %v433, %v436
    %v438 = vmul.f32 %v437, %v419
    %s439 = sadd.s32 %s76, 8
    %s440 = sld [smem:[#allocation2 + %s439]]
    %v441 = vstv %s440
    %v442 = vadd.f32 %v438, %v441
    %v443 = vmul.f32 %v409, %v442
    %v444 = vmul.f32 %v414, %v442
    %v445 = vadd.f32 %v402, %v443
    %v446 = vadd.f32 %v403, %v444
    %447 = vrot.lane.b32.xlu0 %v41, 119
    %v448 = vpop.permute.xlu0 %447
    %449 = vrot.lane.b32.xlu0 %v42, 119
    %v450 = vpop.permute.xlu0 %449
    %vm451 = vcmp.lt.s32.totalorder %v106, 119
    %v452 = vsel %vm451, %v448, %v450
    %453 = vrot.lane.b32.xlu0 %v44, 119
    %v454 = vpop.permute.xlu0 %453
    %455 = vrot.lane.b32.xlu0 %v45, 119
    %v456 = vpop.permute.xlu0 %455
    %v457 = vsel %vm451, %v454, %v456
    %458 = vrot.lane.b32.xlu0 %v63, 119
    %v459 = vpop.permute.xlu0 %458
    %460 = vrot.lane.b32.xlu0 %v75, 119
    %v461 = vpop.permute.xlu0 %460
    %v462 = vsel %vm451, %v459, %v461
    %s463 = sadd.s32 %s76, 53
    %s464 = sld [smem:[#allocation2 + %s463]]
    %v465 = vstv %s464
    %v466 = vmul.f32 %v465, %v462
    %s467 = sadd.s32 %s76, 42
    %s468 = sld [smem:[#allocation2 + %s467]]
    %v469 = vstv %s468
    %v470 = vadd.f32 %v466, %v469
    %v471 = vmul.f32 %v470, %v462
    %s472 = sadd.s32 %s76, 31
    %s473 = sld [smem:[#allocation2 + %s472]]
    %v474 = vstv %s473
    %v475 = vadd.f32 %v471, %v474
    %v476 = vmul.f32 %v475, %v462
    %s477 = sadd.s32 %s76, 20
    %s478 = sld [smem:[#allocation2 + %s477]]
    %v479 = vstv %s478
    %v480 = vadd.f32 %v476, %v479
    %v481 = vmul.f32 %v480, %v462
    %s482 = sadd.s32 %s76, 9
    %s483 = sld [smem:[#allocation2 + %s482]]
    %v484 = vstv %s483
    %v485 = vadd.f32 %v481, %v484
    %v486 = vmul.f32 %v452, %v485
    %v487 = vmul.f32 %v457, %v485
    %v488 = vadd.f32 %v445, %v486
    %v489 = vadd.f32 %v446, %v487
    %490 = vrot.lane.b32.xlu0 %v41, 118
    %v491 = vpop.permute.xlu0 %490
    %492 = vrot.lane.b32.xlu0 %v42, 118
    %v493 = vpop.permute.xlu0 %492
    %vm494 = vcmp.lt.s32.totalorder %v106, 118
    %v495 = vsel %vm494, %v491, %v493
    %496 = vrot.lane.b32.xlu0 %v44, 118
    %v497 = vpop.permute.xlu0 %496
    %498 = vrot.lane.b32.xlu0 %v45, 118
    %v499 = vpop.permute.xlu0 %498
    %v500 = vsel %vm494, %v497, %v499
    %501 = vrot.lane.b32.xlu0 %v63, 118
    %v502 = vpop.permute.xlu0 %501
    %503 = vrot.lane.b32.xlu0 %v75, 118
    %v504 = vpop.permute.xlu0 %503
    %v505 = vsel %vm494, %v502, %v504
    %s506 = sadd.s32 %s76, 54
    %s507 = sld [smem:[#allocation2 + %s506]]
    %v508 = vstv %s507
    %v509 = vmul.f32 %v508, %v505
    %s510 = sadd.s32 %s76, 43
    %s511 = sld [smem:[#allocation2 + %s510]]
    %v512 = vstv %s511
    %v513 = vadd.f32 %v509, %v512
    %v514 = vmul.f32 %v513, %v505
    %s515 = sadd.s32 %s76, 32
    %s516 = sld [smem:[#allocation2 + %s515]]
    %v517 = vstv %s516
    %v518 = vadd.f32 %v514, %v517
    %v519 = vmul.f32 %v518, %v505
    %s520 = sadd.s32 %s76, 21
    %s521 = sld [smem:[#allocation2 + %s520]]
    %v522 = vstv %s521
    %v523 = vadd.f32 %v519, %v522
    %v524 = vmul.f32 %v523, %v505
    %s525 = sadd.s32 %s76, 10
    %s526 = sld [smem:[#allocation2 + %s525]]
    %v527 = vstv %s526
    %v528 = vadd.f32 %v524, %v527
    %v529 = vmul.f32 %v495, %v528
    %v530 = vmul.f32 %v500, %v528
    %v531 = vadd.f32 %v488, %v529
    %v532 = vadd.f32 %v489, %v530
    %533 = vst [vmem:[#allocation7] sm:$0xff] %v531
    %s534 = scalar_lea.vmem [#allocation7], 8
    %535 = vst [vmem:[%s534] sm:$0xff] %v532
    // Predicated region
    $region18: #{tpu_custom_call.1} parent=1 // pred_check
      _
    $region19: #{tpu_custom_call.1} parent=1 // pred_check_branch
      %537 = sbr.rel (0) target = $region21
    $region20: #{tpu_custom_call.1} parent=1 // pred_region
      %539 = vsyncadd [#allocation4], 0
      %s540 = sshll.u32 [#allocation7], 4
      %s541 = int_to_ptr.vmem [resolvable:$true] %s540
      %s542 = sshll.u32 %s2, 4
      %s543 = int_to_ptr.hbm [resolvable:$true] %s542
      %548 = dma.vmem_to_hbm [thread:$0]  %s541, 256, %s543, [#allocation4], 128, 128, 8
    $region21: #{tpu_custom_call.1} parent=1 // pred_fallthru
      _
    // Predicated region
    $region22: #{tpu_custom_call.1} parent=1 // pred_check
      _
    $region23: #{tpu_custom_call.1} parent=1 // pred_check_branch
      %550 = sbr.rel (0) target = $region25
    $region24: #{tpu_custom_call.1} parent=1 // pred_region
      %552 = dma.done [#allocation4], 256
    $region25: #{tpu_custom_call.1} parent=1 // pred_fallthru
      _
    %553 = vsyncpa [#allocation3], 1
    %554 = vsyncpa [#allocation4], 1
    %555 = vsyncpa [#allocation5], 1

</llo_original>
